<compile_context>
chip_gen: v5e
topology: v5e:2x2
jax: 0.10.0
libtpu: 0.0.40
codegen_flags: <defaults>
</compile_context>

<pallas_src>
import jax
import jax.numpy as jnp
from jax import lax
from jax.experimental import pallas as pl
from jax.experimental.pallas import tpu as pltpu

KH = 7        # conv kernel height
PAD = 3       # conv padding along H
SCALE_H = 4   # UpsamplingNearest2d scale factor along H (= st[0])
EPS = 1e-5    # BatchNorm eps


def _conv_bn_relu_kernel(w_ref, x_ref, p_ref, o_ref):
    # (4*Cout, K3) @ (K3, tm) on the MXU, f32 accumulation; output is lane-dense
    # along tm so stores are unmasked full-lane vst.
    y = jnp.dot(w_ref[...], x_ref[...], preferred_element_type=jnp.float32)
    p = p_ref[...]                       # (4*Cout, 4) = [s1, b1, s2, b2]
    s1 = p[:, 0:1]
    b1 = p[:, 1:2]
    s2 = p[:, 2:3]
    b2 = p[:, 3:4]
    y = jnp.maximum(y * s1 + b1, 0.0)    # conv-bias + BN1 folded into s1/b1
    y = jnp.maximum(y * s2 + b2, 0.0)    # BN2 + ReLU
    o_ref[...] = y.astype(o_ref.dtype)


def _pick_tm(m, *, lane=128, cap=2048):
    """Largest lane-multiple tile <= cap that keeps >= 2 grid steps if possible."""
    if m <= lane:
        return lane
    half = (m // 2) // lane * lane
    return max(lane, min(cap, half))


def _fold_weights(w):
    """(Cout, Cin, 7, 1) torch OIHW -> phase-wise 3-tap weights (4*Cout, 3*Cin).

    Nearest x4 upsample along H followed by a 7-tap / pad-3 conv is equivalent,
    for output phase p = h_out % 4, to a 3-tap conv over the original rows:
      tap index d = floor((p + kh - 3) / 4) in {-1, 0, 1};
      W_eff[p, :, :, d+1] += w[:, :, kh].
    """
    cout, cin = w.shape[0], w.shape[1]
    w2 = w[:, :, :, 0]                                   # (Cout, Cin, 7)
    w_eff = jnp.zeros((SCALE_H, cout, cin, 3), w2.dtype)
    for p in range(SCALE_H):
        for kh in range(KH):
            d = (p + kh - PAD) // SCALE_H                # python floor division
            w_eff = w_eff.at[p, :, :, d + 1].add(w2[:, :, kh])
    # k ordering = (d, ci) to match the activation layout below
    return jnp.transpose(w_eff, (0, 1, 3, 2)).reshape(SCALE_H * cout, 3 * cin)


def conv2dt_forward(x, w, conv_b, bn1, bn2, *, compute_dtype=jnp.bfloat16):
    """x: (N, Cin, H, W) f32; w: (Cout, Cin, 7, 1) torch OIHW layout."""
    N, Cin, H, W = x.shape
    Cout = w.shape[0]
    K3 = 3 * Cin
    CO4 = SCALE_H * Cout
    M = N * H * W

    # ---- activations: pad H by 1, build the 3-tap window in (K, M) layout ----
    x_pad = jnp.pad(x, ((0, 0), (0, 0), (1, 1), (0, 0)))          # (N, Cin, H+2, W)
    taps = jnp.stack([x_pad[:, :, d:d + H, :] for d in range(3)], axis=0)
    x_t = jnp.transpose(taps, (0, 2, 1, 3, 4)).reshape(K3, M)     # (3*Cin, M)
    x_t = x_t.astype(compute_dtype)

    # ---- weights: fold the upsample into phase-wise 3-tap kernels ----
    w_mat = _fold_weights(w).astype(compute_dtype)                # (4*Cout, 3*Cin)

    # ---- fold conv bias + BN running stats into per-channel scale/bias ----
    g1, be1, m1, v1 = bn1
    g2, be2, m2, v2 = bn2
    s1 = g1 / jnp.sqrt(v1 + EPS)
    b1 = be1 - m1 * s1 + conv_b * s1               # conv bias folded here
    s2 = g2 / jnp.sqrt(v2 + EPS)
    b2 = be2 - m2 * s2
    # single packed (4*Cout, 4) array: columns = [s1, b1, s2, b2], tiled over phases
    params = jnp.stack(
        [jnp.tile(s1, SCALE_H), jnp.tile(b1, SCALE_H),
         jnp.tile(s2, SCALE_H), jnp.tile(b2, SCALE_H)], axis=1
    ).astype(jnp.float32)                                          # (4*Cout, 4)

    # ---- tiling: lane-dense along M; ragged M handled by zero padding ----
    tm = _pick_tm(M)
    m_pad = pl.cdiv(M, tm) * tm
    if m_pad != M:
        x_t = jnp.pad(x_t, ((0, 0), (0, m_pad - M)))
    grid = (m_pad // tm,)

    out_t = pl.pallas_call(
        _conv_bn_relu_kernel,
        out_shape=jax.ShapeDtypeStruct((CO4, m_pad), jnp.float32),
        grid_spec=pltpu.PrefetchScalarGridSpec(
            num_scalar_prefetch=0,
            grid=grid,
            in_specs=[
                pl.BlockSpec((CO4, K3), lambda i: (0, 0)),   # weights (resident)
                pl.BlockSpec((K3, tm), lambda i: (0, i)),    # activation tile
                pl.BlockSpec((CO4, 4), lambda i: (0, 0)),    # packed scale/bias
            ],
            out_specs=pl.BlockSpec((CO4, tm), lambda i: (0, i)),
        ),
        compiler_params=pltpu.CompilerParams(
            dimension_semantics=("parallel",)),
    )(w_mat, x_t, params)

    # (4*Cout, M) -> un-interleave phases along H -> NCHW (N, Cout, 4H, W)
    out_t = out_t[:, :M].reshape(SCALE_H, Cout, N, H, W)
    return jnp.transpose(out_t, (2, 1, 3, 0, 4)).reshape(N, Cout, SCALE_H * H, W)


def _reference(x, w, conv_b, bn1, bn2):
    """Pure-JAX f32 reference mirroring the PyTorch forward (inference-mode BN)."""
    x_up = jnp.repeat(x, SCALE_H, axis=2)
    y = lax.conv_general_dilated(
        x_up, w, window_strides=(1, 1), padding=((PAD, PAD), (0, 0)),
        dimension_numbers=("NCHW", "OIHW", "NCHW"))
    y = y + conv_b[None, :, None, None]

    def bn(t, p):
        g, b, m, v = p
        return ((t - m[None, :, None, None])
                / jnp.sqrt(v[None, :, None, None] + EPS)
                * g[None, :, None, None] + b[None, :, None, None])

    y = jnp.maximum(bn(y, bn1), 0.0)
    y = jnp.maximum(bn(y, bn2), 0.0)
    return y


if __name__ == "__main__":
    # small shapes consistent with the module defaults (nin=8, nout=11)
    N, Cin, H, W = 2, 8, 8, 16
    Cout = 11

    key = jax.random.PRNGKey(0)
    keys = jax.random.split(key, 8)
    x = jax.random.normal(keys[0], (N, Cin, H, W), jnp.float32)

    # deterministic synthetic parameters (same shapes as the torch module)
    w = 0.1 * jax.random.normal(keys[1], (Cout, Cin, KH, 1), jnp.float32)
    conv_b = 0.1 * jax.random.normal(keys[2], (Cout,), jnp.float32)

    def bn_params(k):
        ka, kb, kc, kd = jax.random.split(k, 4)
        gamma = jax.random.uniform(ka, (Cout,), jnp.float32, 0.5, 1.5)
        beta = 0.1 * jax.random.normal(kb, (Cout,), jnp.float32)
        mean = 0.1 * jax.random.normal(kc, (Cout,), jnp.float32)
        var = jax.random.uniform(kd, (Cout,), jnp.float32, 0.5, 1.5)
        return (gamma, beta, mean, var)

    bn1 = bn_params(keys[3])
    bn2 = bn_params(keys[4])

    ref = _reference(x, w, conv_b, bn1, bn2)

    # 1) algebra check: f32 compute path vs. the pure-JAX reference (tight tol).
    out_f32 = jax.block_until_ready(
        conv2dt_forward(x, w, conv_b, bn1, bn2, compute_dtype=jnp.float32))
    assert out_f32.shape == (N, Cout, H * SCALE_H, W), out_f32.shape
    assert jnp.allclose(out_f32, ref, rtol=1e-4, atol=1e-4), \
        float(jnp.max(jnp.abs(out_f32 - ref)))

    # 2) performance path: bf16 activations/weights, f32 accumulation.
    #    Loose tolerance only accounts for bf16 input rounding; the algebra is
    #    verified exactly by the f32 check above.
    out = jax.block_until_ready(conv2dt_forward(x, w, conv_b, bn1, bn2))
    assert out.shape == (N, Cout, H * SCALE_H, W), out.shape
    assert jnp.allclose(out, ref, rtol=5e-2, atol=1e-1), \
        float(jnp.max(jnp.abs(out - ref)))

    print("KERNEL_OK")
</pallas_src>

<mosaic_0001>
module attributes {stable_mosaic.version = 11 : i64} {
  func.func @_conv_bn_relu_kernel(%arg0: i32, %arg1: memref<44x24xf32, #tpu.memory_space<vmem>>, %arg2: memref<24x128xf32, #tpu.memory_space<vmem>>, %arg3: memref<44x4xf32, #tpu.memory_space<vmem>>, %arg4: memref<44x128xf32, #tpu.memory_space<vmem>>) attributes {dimension_semantics = [#tpu.dimension_semantics<parallel>], iteration_bounds = array<i64: 2>, scalar_prefetch = 0 : i64, scratch_operands = 0 : i64, tpu.core_type = #tpu.core_type<tc>, window_params = [{pipeline_mode = #tpu.pipeline_mode<synchronous>, transform_indices = @transform_0, window_bounds = array<i64: 44, 24>}, {transform_indices = @transform_1, window_bounds = array<i64: 24, 128>}, {pipeline_mode = #tpu.pipeline_mode<synchronous>, transform_indices = @transform_2, window_bounds = array<i64: 44, 4>}, {transform_indices = @transform_3, window_bounds = array<i64: 44, 128>}]} {
    %c0 = arith.constant 0 : index
    %c0_0 = arith.constant 0 : index
    %0 = vector.load %arg1[%c0, %c0_0] : memref<44x24xf32, #tpu.memory_space<vmem>>, vector<44x24xf32>
    %c0_1 = arith.constant 0 : index
    %c0_2 = arith.constant 0 : index
    %1 = vector.load %arg2[%c0_1, %c0_2] : memref<24x128xf32, #tpu.memory_space<vmem>>, vector<24x128xf32>
    %cst = arith.constant dense<0.000000e+00> : vector<44x128xf32>
    %2 = tpu.matmul %0, %1, %cst {dimension_numbers = #tpu.dot_dimension_numbers<[1], [0], [0], [1], [0, 0, 1, 1], [], []>} : vector<44x24xf32>, vector<24x128xf32>, vector<44x128xf32> -> vector<44x128xf32>
    %c0_3 = arith.constant 0 : index
    %c0_4 = arith.constant 0 : index
    %3 = vector.load %arg3[%c0_3, %c0_4] : memref<44x4xf32, #tpu.memory_space<vmem>>, vector<44x4xf32>
    %4 = vector.extract_strided_slice %3 {offsets = [0, 0], sizes = [44, 1], strides = [1, 1]} : vector<44x4xf32> to vector<44x1xf32>
    %5 = vector.extract_strided_slice %3 {offsets = [0, 1], sizes = [44, 1], strides = [1, 1]} : vector<44x4xf32> to vector<44x1xf32>
    %6 = vector.extract_strided_slice %3 {offsets = [0, 2], sizes = [44, 1], strides = [1, 1]} : vector<44x4xf32> to vector<44x1xf32>
    %7 = vector.extract_strided_slice %3 {offsets = [0, 3], sizes = [44, 1], strides = [1, 1]} : vector<44x4xf32> to vector<44x1xf32>
    %8 = vector.broadcast %4 : vector<44x1xf32> to vector<44x128xf32>
    %9 = arith.mulf %2, %8 : vector<44x128xf32>
    %10 = vector.broadcast %5 : vector<44x1xf32> to vector<44x128xf32>
    %11 = arith.addf %9, %10 : vector<44x128xf32>
    %cst_5 = arith.constant 0.000000e+00 : f32
    %12 = vector.broadcast %cst_5 : f32 to vector<44x128xf32>
    %13 = arith.maximumf %11, %12 : vector<44x128xf32>
    %14 = vector.broadcast %6 : vector<44x1xf32> to vector<44x128xf32>
    %15 = arith.mulf %13, %14 : vector<44x128xf32>
    %16 = vector.broadcast %7 : vector<44x1xf32> to vector<44x128xf32>
    %17 = arith.addf %15, %16 : vector<44x128xf32>
    %cst_6 = arith.constant 0.000000e+00 : f32
    %18 = vector.broadcast %cst_6 : f32 to vector<44x128xf32>
    %19 = arith.maximumf %17, %18 : vector<44x128xf32>
    %c0_7 = arith.constant 0 : index
    %c0_8 = arith.constant 0 : index
    %20 = vector.load %arg4[%c0_7, %c0_8] : memref<44x128xf32, #tpu.memory_space<vmem>>, vector<44x128xf32>
    tpu.vector_store %arg4[%c0_7, %c0_8], %19 {strides = array<i32>} : memref<44x128xf32, #tpu.memory_space<vmem>>, vector<44x128xf32>,
    return
  }
  func.func @transform_0(%arg0: i32) -> (i32, i32) {
    %c0_i32 = arith.constant 0 : i32
    %c0_i32_0 = arith.constant 0 : i32
    %c0_i32_1 = arith.constant 0 : i32
    return %c0_i32, %c0_i32_0 : i32, i32
  }
  func.func @transform_1(%arg0: i32) -> (i32, i32) {
    %c0_i32 = arith.constant 0 : i32
    %c0_i32_0 = arith.constant 0 : i32
    return %c0_i32, %arg0 : i32, i32
  }
  func.func @transform_2(%arg0: i32) -> (i32, i32) {
    %c0_i32 = arith.constant 0 : i32
    %c0_i32_0 = arith.constant 0 : i32
    %c0_i32_1 = arith.constant 0 : i32
    return %c0_i32, %c0_i32_0 : i32, i32
  }
  func.func @transform_3(%arg0: i32) -> (i32, i32) {
    %c0_i32 = arith.constant 0 : i32
    %c0_i32_0 = arith.constant 0 : i32
    return %c0_i32, %arg0 : i32, i32
  }
}

</mosaic_0001>

<llo_original>
// kernel: tpu_custom_call.1
$region0: #{tpu_custom_call.1}
  #allocation0 [shape = 'u32[]', space=smem, size = 0x4, offset = 0x4, fixed_abs, tag = 'smem constant byte address 0x4 - core index']
  #allocation1 [shape = 'u32[72,128]{1,0:T(1,128)}', space=vmem, size = 0x9000, scoped, tag = 'internal scratch']
  %s0 = inlined_call_operand.vmem [shape: f32[44,24], index: 0, kind: input, shape index: {}]
  %s1 = inlined_call_operand.vmem [shape: f32[24,256], index: 1, kind: input, shape index: {}]
  %s2 = inlined_call_operand.vmem [shape: f32[44,4], index: 2, kind: input, shape index: {}]
  %s3 = inlined_call_operand.hbm [shape: f32[44,256], index: 3, kind: output, shape index: {}]
  %s4 = sld [smem:[#allocation0]]
  $region83: #{tpu_custom_call.1} parent=0
    _
  %s6 = ssub.s32 1, %s4
  %s7 = scalar_select 0, %s6, %s4
  $region1: #{tpu_custom_call.1} parent=0
    #allocation2 [shape = 'u8[24576]{0}', space=vmem, size = 0x6000, scoped, tag = 'input window, operand 1']
    #allocation3 [shape = 'u8[49152]{0}', space=vmem, size = 0xc000, scoped, tag = 'output window, operand 0']
    #allocation4 [shape = 's32[2]{0}', space=sflag, size = 0x8, scoped, tag = 'scoped memory for tpu_custom_call.1']
    %8 = vsyncpa [#allocation4], 0
    %s9 = scalar_lea.sflag [#allocation4], 1
    %10 = vsyncpa %s9, 0
    loop: start=0, step=1, limit=4
    $region2: #{tpu_custom_call.1} parent=1 // loop_pre_header
      _
    $region3: #{tpu_custom_call.1} parent=1 // loop_header
      %s12 = sphi 0, %s16
      %p13 = scmp.ge.s32.totalorder %s12, 4
      %s20 = sphi 0, %s20
      %s22 = sphi 0, %s20
      %s23 = sphi 0, %s22
      %s37 = sphi 0, %s23
      %s43 = sphi 0, %s45
      %s46 = sphi 0, %s43
      %s47 = sphi 0, %s46
      %s63 = sphi 0, %s47
      %s67 = sphi 0, %s67
      %s69 = sphi 0, %s67
      %s70 = sphi 0, %s69
      %s84 = sphi 0, %s70
      %s90 = sphi 0, %s92
      %s93 = sphi 0, %s90
      %s94 = sphi 0, %s93
      %s110 = sphi 0, %s94
    $region4: #{tpu_custom_call.1} parent=1 // loop_header_branch
      %15 = sbr.rel (%p13) target = $region8
    $region5: #{tpu_custom_call.1} parent=1 // loop_body
      %s17 = ssub.s32 %s12, 1
      %s18 = ssub.s32 %s12, 2
      %s19 = sadd.s32 %s12, 1
      %s21 = sadd.s32 %s20, 1
      %p24 = scmp.eq.s32.totalorder %s12, 1
      %p25 = scmp.ne.s32.totalorder %s20, %s22
      %p26 = scmp.eq.s32.totalorder %s12, 0
      %p27 = por %p25, %p26
      %p28 = scmp.ne.s32.totalorder %s20, %s22
      %p29 = scmp.eq.s32.totalorder %s17, 1
      %p30 = por %p28, %p29
      %p31 = scmp.ne.s32.totalorder %s22, %s23
      %p32 = scmp.eq.s32.totalorder %s17, 0
      %p33 = por %p31, %p32
      %p34 = scmp.ne.s32.totalorder %s22, %s23
      %p35 = scmp.eq.s32.totalorder %s18, 1
      %p36 = por %p34, %p35
      %p38 = scmp.ne.s32.totalorder %s23, %s37
      %p39 = scmp.eq.s32.totalorder %s18, 0
      %p40 = por %p38, %p39
      %s41 = ssub.s32 %s12, %s19
      %p42 = scmp.eq.s32.totalorder %s41, 0
      %s44 = sadd.s32 %s43, 1
      %s45 = scalar_select %p42, %s43, %s44
      %p48 = pneg %p42
      %p49 = scmp.eq.s32.totalorder %s12, 1
      %p50 = por %p48, %p49
      %p51 = scmp.ne.s32.totalorder %s43, %s46
      %p52 = scmp.eq.s32.totalorder %s12, 0
      %p53 = por %p51, %p52
      %p54 = scmp.ne.s32.totalorder %s43, %s46
      %p55 = scmp.eq.s32.totalorder %s17, 1
      %p56 = por %p54, %p55
      %p57 = scmp.ne.s32.totalorder %s46, %s47
      %p58 = scmp.eq.s32.totalorder %s17, 0
      %p59 = por %p57, %p58
      %p60 = scmp.ne.s32.totalorder %s46, %s47
      %p61 = scmp.eq.s32.totalorder %s18, 1
      %p62 = por %p60, %p61
      %p64 = scmp.ne.s32.totalorder %s47, %s63
      %p65 = scmp.eq.s32.totalorder %s18, 0
      %p66 = por %p64, %p65
      %s68 = sadd.s32 %s67, 1
      %p71 = scmp.eq.s32.totalorder %s12, 1
      %p72 = scmp.ne.s32.totalorder %s67, %s69
      %p73 = scmp.eq.s32.totalorder %s12, 0
      %p74 = por %p72, %p73
      %p75 = scmp.ne.s32.totalorder %s67, %s69
      %p76 = scmp.eq.s32.totalorder %s17, 1
      %p77 = por %p75, %p76
      %p78 = scmp.ne.s32.totalorder %s69, %s70
      %p79 = scmp.eq.s32.totalorder %s17, 0
      %p80 = por %p78, %p79
      %p81 = scmp.ne.s32.totalorder %s69, %s70
      %p82 = scmp.eq.s32.totalorder %s18, 1
      %p83 = por %p81, %p82
      %p85 = scmp.ne.s32.totalorder %s70, %s84
      %p86 = scmp.eq.s32.totalorder %s18, 0
      %p87 = por %p85, %p86
      %s88 = ssub.s32 %s12, %s19
      %p89 = scmp.eq.s32.totalorder %s88, 0
      %s91 = sadd.s32 %s90, 1
      %s92 = scalar_select %p89, %s90, %s91
      %p95 = pneg %p89
      %p96 = scmp.eq.s32.totalorder %s12, 1
      %p97 = por %p95, %p96
      %p98 = scmp.ne.s32.totalorder %s90, %s93
      %p99 = scmp.eq.s32.totalorder %s12, 0
      %p100 = por %p98, %p99
      %p101 = scmp.ne.s32.totalorder %s90, %s93
      %p102 = scmp.eq.s32.totalorder %s17, 1
      %p103 = por %p101, %p102
      %p104 = scmp.ne.s32.totalorder %s93, %s94
      %p105 = scmp.eq.s32.totalorder %s17, 0
      %p106 = por %p104, %p105
      %p107 = scmp.ne.s32.totalorder %s93, %s94
      %p108 = scmp.eq.s32.totalorder %s18, 1
      %p109 = por %p107, %p108
      %p111 = scmp.ne.s32.totalorder %s94, %s110
      %p112 = scmp.eq.s32.totalorder %s18, 0
      %p113 = por %p111, %p112
      %p114 = scmp.le.s32.totalorder 1, %s12
      %p115 = scmp.lt.s32.totalorder %s12, 3
      %p116 = pnand %p114, %p115
      %p117 = pneg %p116
      // Predicated region
      $region9: #{tpu_custom_call.1} parent=5 // pred_check
        _
      $region10: #{tpu_custom_call.1} parent=5 // pred_check_branch
        %119 = sbr.rel (%p116) target = $region12
      $region11: #{tpu_custom_call.1} parent=5 // pred_region
        %s120 = ssub.s32 %s12, 1
        // Predicated region
        $region13: #{tpu_custom_call.1} parent=11 // pred_check
          %p121 = pneg %p33
        $region14: #{tpu_custom_call.1} parent=11 // pred_check_branch
          %123 = sbr.rel (%p121) target = $region16
        $region15: #{tpu_custom_call.1} parent=11 // pred_region
          _
        $region16: #{tpu_custom_call.1} parent=11 // pred_fallthru
          _
        // Predicated region
        $region17: #{tpu_custom_call.1} parent=11 // pred_check
          %p124 = pneg %p80
        $region18: #{tpu_custom_call.1} parent=11 // pred_check_branch
          %126 = sbr.rel (%p124) target = $region20
        $region19: #{tpu_custom_call.1} parent=11 // pred_region
          _
        $region20: #{tpu_custom_call.1} parent=11 // pred_fallthru
          _
      $region12: #{tpu_custom_call.1} parent=5 // pred_fallthru
        _
      %p127 = scmp.lt.s32.totalorder %s12, 2
      // Predicated region
      $region21: #{tpu_custom_call.1} parent=5 // pred_check
        %p128 = pneg %p127
      $region22: #{tpu_custom_call.1} parent=5 // pred_check_branch
        %130 = sbr.rel (%p128) target = $region24
      $region23: #{tpu_custom_call.1} parent=5 // pred_region
        // Predicated region
        $region25: #{tpu_custom_call.1} parent=23 // pred_check
          %p131 = pneg %p53
        $region26: #{tpu_custom_call.1} parent=23 // pred_check_branch
          %133 = sbr.rel (%p131) target = $region28
        $region27: #{tpu_custom_call.1} parent=23 // pred_region
          %s134 = sand.u32 %s43, 1
          %s135 = sand.u32 %s43, 1
          %s136 = smul.addr %s135, 24
          %s137 = scalar_lea.vmem [#allocation2], %s136
          %s138 = smul.addr %s12, 8
          %s139 = scalar_lea.vmem %s1, %s138
          // Predicated region
          $region29: #{tpu_custom_call.1} parent=27 // pred_check
            _
          $region30: #{tpu_custom_call.1} parent=27 // pred_check_branch
            %141 = sbr.rel (0) target = $region32
          $region31: #{tpu_custom_call.1} parent=27 // pred_region
            // Predicated region
            $region33: #{tpu_custom_call.1} parent=31 // pred_check
              _
            $region34: #{tpu_custom_call.1} parent=31 // pred_check_branch
              %143 = sbr.rel (0) target = $region36
            $region35: #{tpu_custom_call.1} parent=31 // pred_region
              // Predicated region
              $region48: #{tpu_custom_call.1} parent=35 // pred_check
                _
              $region49: #{tpu_custom_call.1} parent=35 // pred_check_branch
                %163 = sbr.rel (0) target = $region51
              $region50: #{tpu_custom_call.1} parent=35 // pred_region
                loop: start=0, step=1, limit=1
                $region52: #{tpu_custom_call.1} parent=50 // loop_pre_header
                  _
                $region53: #{tpu_custom_call.1} parent=50 // loop_header
                  %s165 = sphi 0, %s169
                  %p166 = scmp.ge.s32.totalorder %s165, 1
                  %s170 = sphi %s139, %s139
                  %s171 = sphi %s137, %s137
                $region54: #{tpu_custom_call.1} parent=50 // loop_header_branch
                  %168 = sbr.rel (%p166) target = $region58
                $region55: #{tpu_custom_call.1} parent=50 // loop_body
                  %v172 = vld [vmem:[%s170] sm:$0xff]
                  %173 = vst [vmem:[%s171] sm:$0xff] %v172
                  %v174 = vld [vmem:[%s170 + $0x10] sm:$0xff]
                  %175 = vst [vmem:[%s171 + $0x8] sm:$0xff] %v174
                  %v176 = vld [vmem:[%s170 + $0x20] sm:$0xff]
                  %177 = vst [vmem:[%s171 + $0x10] sm:$0xff] %v176
                $region56: #{tpu_custom_call.1} parent=50 // loop_footer
                  %s169 = sadd.s32 1, %s165
                $region57: #{tpu_custom_call.1} parent=50 // loop_footer_branch
                  %164 = sbr.rel target = $region53
                $region58: #{tpu_custom_call.1} parent=50 // loop_exit
                  _
              $region51: #{tpu_custom_call.1} parent=35 // pred_fallthru
                _
              // Predicated region
              $region59: #{tpu_custom_call.1} parent=35 // pred_check
                _
              $region60: #{tpu_custom_call.1} parent=35 // pred_check_branch
                %179 = sbr.rel target = $region62
              $region61: #{tpu_custom_call.1} parent=35 // pred_region
                _
              $region62: #{tpu_custom_call.1} parent=35 // pred_fallthru
                _
            $region36: #{tpu_custom_call.1} parent=31 // pred_fallthru
              _
            // Predicated region
            $region37: #{tpu_custom_call.1} parent=31 // pred_check
              _
            $region38: #{tpu_custom_call.1} parent=31 // pred_check_branch
              %145 = sbr.rel target = $region40
            $region39: #{tpu_custom_call.1} parent=31 // pred_region
              %s147 = ssub.s32 256, 1
              loop: start=0, step=1, limit=1
              $region41: #{tpu_custom_call.1} parent=39 // loop_pre_header
                _
              $region42: #{tpu_custom_call.1} parent=39 // loop_header
                %s149 = sphi 0, %s153
                %p150 = scmp.ge.s32.totalorder %s149, 1
                %s154 = sphi %s139, %s139
                %s155 = sphi %s137, %s137
              $region43: #{tpu_custom_call.1} parent=39 // loop_header_branch
                %152 = sbr.rel (%p150) target = $region47
              $region44: #{tpu_custom_call.1} parent=39 // loop_body
                %v156 = vld [vmem:[%s154] sm:%s147]
                %157 = vst [vmem:[%s155] sm:%s147] %v156
                %v158 = vld [vmem:[%s154 + $0x10] sm:%s147]
                %159 = vst [vmem:[%s155 + $0x8] sm:%s147] %v158
                %v160 = vld [vmem:[%s154 + $0x20] sm:%s147]
                %161 = vst [vmem:[%s155 + $0x10] sm:%s147] %v160
              $region45: #{tpu_custom_call.1} parent=39 // loop_footer
                %s153 = sadd.s32 1, %s149
              $region46: #{tpu_custom_call.1} parent=39 // loop_footer_branch
                %148 = sbr.rel target = $region42
              $region47: #{tpu_custom_call.1} parent=39 // loop_exit
                _
            $region40: #{tpu_custom_call.1} parent=31 // pred_fallthru
              _
          $region32: #{tpu_custom_call.1} parent=27 // pred_fallthru
            _
          %180 = vnop
        $region28: #{tpu_custom_call.1} parent=23 // pred_fallthru
          _
      $region24: #{tpu_custom_call.1} parent=5 // pred_fallthru
        _
      %p181 = scmp.le.s32.totalorder 1, %s12
      %p182 = scmp.lt.s32.totalorder %s12, 3
      %p183 = pnand %p181, %p182
      %p184 = pneg %p183
      // Predicated region
      $region63: #{tpu_custom_call.1} parent=5 // pred_check
        _
      $region64: #{tpu_custom_call.1} parent=5 // pred_check_branch
        %186 = sbr.rel (%p183) target = $region66
      $region65: #{tpu_custom_call.1} parent=5 // pred_region
        %s187 = ssub.s32 %s12, 1
        %s188 = sand.u32 %s46, 1
        %s189 = sand.u32 %s46, 1
        %s190 = smul.addr %s189, 24
        %s191 = scalar_lea.vmem [#allocation2], %s190
        // Predicated region
        $region67: #{tpu_custom_call.1} parent=65 // pred_check
          %p192 = pneg %p59
        $region68: #{tpu_custom_call.1} parent=65 // pred_check_branch
          %194 = sbr.rel (%p192) target = $region70
        $region69: #{tpu_custom_call.1} parent=65 // pred_region
          _
        $region70: #{tpu_custom_call.1} parent=65 // pred_fallthru
          _
        %p195 = pneg %p33
        %p196 = pneg %p30
        %s197 = sand.u32 %s46, 1
        %s198 = sand.u32 %s46, 1
        %s199 = smul.addr %s198, 24
        %s200 = scalar_lea.vmem [#allocation2], %s199
        %p201 = pneg %p59
        %p202 = pneg %p56
        %p203 = pneg %p80
        %p204 = pneg %p77
        %p205 = pneg %p106
        %p206 = pneg %p103
        %s207 = sand.u32 %s93, 1
        %s208 = scalar_lea.sflag [#allocation4], %s207
        %s209 = sand.u32 %s93, 1
        %s210 = smul.addr %s209, 48
        %s211 = scalar_lea.vmem [#allocation3], %s210
        %v212 = vld [vmem:[%s0] sm:$0xff]
        %v213 = vld [vmem:[%s0 + $0x8] sm:$0xff]
        %v214 = vld [vmem:[%s0 + $0x10] sm:$0xff]
        %v215 = vld [vmem:[%s0 + $0x18] sm:$0xff]
        %v216 = vld [vmem:[%s0 + $0x20] sm:$0xff]
        %v217 = vld [vmem:[%s0 + $0x28] sm:$0xf]
        %v218 = vld [vmem:[%s191] sm:$0xff]
        %v219 = vld [vmem:[%s191 + $0x8] sm:$0xff]
        %v220 = vld [vmem:[%s191 + $0x10] sm:$0xff]
        %vm221 = vcmask 195584
        %v223 = vsel %vm221, %v212, 0
        %v226 = vsel %vm221, %v213, 0
        %v229 = vsel %vm221, %v214, 0
        %v232 = vsel %vm221, %v215, 0
        %v235 = vsel %vm221, %v216, 0
        %v238 = vsel %vm221, %v217, 0
        %240 = vmatpush.msra.mxu0 0.0
        %241 = vmatpush.msra.mxu0 0.0
        %242 = vmatpush.msra.mxu0 0.0
        %243 = vmatpush.msra.mxu0 0.0
        %244 = vmatpush.msra.mxu0 0.0
        %245 = vmatpush.msra.mxu0 0.0
        %246 = vmatpush.msra.mxu0 0.0
        %247 = vmatpush.msra.mxu0 0.0
        %248 = vmatpush.msra.mxu0 0.0
        %249 = vmatpush.msra.mxu0 0.0
        %250 = vmatpush.msra.mxu0 0.0
        %251 = vmatpush.msra.mxu0 0.0
        %252 = vmatpush.msra.mxu0 0.0
        %253 = vmatpush.msra.mxu0 %v220
        %254 = vmatpush.msra.mxu0 %v219
        %255 = vmatpush.msra.mxu0 %v218
        %256 = vmatmul.f32.gmra.mxu0 %v223
        %v257 = vpop.f32.mrf.mxu0
        %v258 = vadd.f32 0.0, %v257
        %259 = vmatmul.f32.gmra.mxu0 %v226
        %v260 = vpop.f32.mrf.mxu0
        %v261 = vadd.f32 0.0, %v260
        %262 = vmatmul.f32.gmra.mxu0 %v229
        %v263 = vpop.f32.mrf.mxu0
        %v264 = vadd.f32 0.0, %v263
        %265 = vmatmul.f32.gmra.mxu0 %v232
        %v266 = vpop.f32.mrf.mxu0
        %v267 = vadd.f32 0.0, %v266
        %268 = vmatmul.f32.gmra.mxu0 %v235
        %v269 = vpop.f32.mrf.mxu0
        %v270 = vadd.f32 0.0, %v269
        %271 = vmatmul.f32.gmra.mxu0 %v238
        %v272 = vpop.f32.mrf.mxu0
        %v273 = vadd.f32 0.0, %v272
        %274 = vdwg.mxu0
        %v275 = vld [vmem:[%s2] sm:$0xff]
        %v276 = vld [vmem:[%s2 + $0x8] sm:$0xff]
        %v277 = vld [vmem:[%s2 + $0x10] sm:$0xff]
        %v278 = vld [vmem:[%s2 + $0x18] sm:$0xff]
        %v279 = vld [vmem:[%s2 + $0x20] sm:$0xff]
        %v280 = vld [vmem:[%s2 + $0x28] sm:$0xf]
        %282 = vset.pattern.permute.xlu0 0
        %283 = vperm.xlu0 %282, %v275
        %v284 = vpop.permute.xlu0 %283
        %287 = vset.pattern.permute.xlu0 0
        %288 = vperm.xlu0 %287, %v276
        %v289 = vpop.permute.xlu0 %288
        %292 = vset.pattern.permute.xlu0 0
        %293 = vperm.xlu0 %292, %v277
        %v294 = vpop.permute.xlu0 %293
        %297 = vset.pattern.permute.xlu0 0
        %298 = vperm.xlu0 %297, %v278
        %v299 = vpop.permute.xlu0 %298
        %302 = vset.pattern.permute.xlu0 0
        %303 = vperm.xlu0 %302, %v279
        %v304 = vpop.permute.xlu0 %303
        %307 = vset.pattern.permute.xlu0 0
        %308 = vperm.xlu0 %307, %v280
        %v309 = vpop.permute.xlu0 %308
        %v311 = vmul.f32 %v258, %v284
        %v312 = vmul.f32 %v261, %v289
        %v313 = vmul.f32 %v264, %v294
        %v314 = vmul.f32 %v267, %v299
        %v315 = vmul.f32 %v270, %v304
        %v316 = vmul.f32 %v273, %v309
        %317 = vset.pattern.permute.xlu0 1
        %318 = vperm.xlu0 %317, %v275
        %v319 = vpop.permute.xlu0 %318
        %321 = vset.pattern.permute.xlu0 1
        %322 = vperm.xlu0 %321, %v276
        %v323 = vpop.permute.xlu0 %322
        %325 = vset.pattern.permute.xlu0 1
        %326 = vperm.xlu0 %325, %v277
        %v327 = vpop.permute.xlu0 %326
        %329 = vset.pattern.permute.xlu0 1
        %330 = vperm.xlu0 %329, %v278
        %v331 = vpop.permute.xlu0 %330
        %333 = vset.pattern.permute.xlu0 1
        %334 = vperm.xlu0 %333, %v279
        %v335 = vpop.permute.xlu0 %334
        %337 = vset.pattern.permute.xlu0 1
        %338 = vperm.xlu0 %337, %v280
        %v339 = vpop.permute.xlu0 %338
        %v341 = vadd.f32 %v311, %v319
        %v342 = vadd.f32 %v312, %v323
        %v343 = vadd.f32 %v313, %v327
        %v344 = vadd.f32 %v314, %v331
        %v345 = vadd.f32 %v315, %v335
        %v346 = vadd.f32 %v316, %v339
        %v347 = vmax.f32 %v341, 0.0
        %v348 = vmax.f32 %v342, 0.0
        %v349 = vmax.f32 %v343, 0.0
        %v350 = vmax.f32 %v344, 0.0
        %v351 = vmax.f32 %v345, 0.0
        %v352 = vmax.f32 %v346, 0.0
        %353 = vset.pattern.permute.xlu0 2
        %354 = vperm.xlu0 %353, %v275
        %v355 = vpop.permute.xlu0 %354
        %357 = vset.pattern.permute.xlu0 2
        %358 = vperm.xlu0 %357, %v276
        %v359 = vpop.permute.xlu0 %358
        %361 = vset.pattern.permute.xlu0 2
        %362 = vperm.xlu0 %361, %v277
        %v363 = vpop.permute.xlu0 %362
        %365 = vset.pattern.permute.xlu0 2
        %366 = vperm.xlu0 %365, %v278
        %v367 = vpop.permute.xlu0 %366
        %369 = vset.pattern.permute.xlu0 2
        %370 = vperm.xlu0 %369, %v279
        %v371 = vpop.permute.xlu0 %370
        %373 = vset.pattern.permute.xlu0 2
        %374 = vperm.xlu0 %373, %v280
        %v375 = vpop.permute.xlu0 %374
        %v377 = vmul.f32 %v347, %v355
        %v378 = vmul.f32 %v348, %v359
        %v379 = vmul.f32 %v349, %v363
        %v380 = vmul.f32 %v350, %v367
        %v381 = vmul.f32 %v351, %v371
        %v382 = vmul.f32 %v352, %v375
        %383 = vset.pattern.permute.xlu0 3
        %384 = vperm.xlu0 %383, %v275
        %v385 = vpop.permute.xlu0 %384
        %387 = vset.pattern.permute.xlu0 3
        %388 = vperm.xlu0 %387, %v276
        %v389 = vpop.permute.xlu0 %388
        %391 = vset.pattern.permute.xlu0 3
        %392 = vperm.xlu0 %391, %v277
        %v393 = vpop.permute.xlu0 %392
        %395 = vset.pattern.permute.xlu0 3
        %396 = vperm.xlu0 %395, %v278
        %v397 = vpop.permute.xlu0 %396
        %399 = vset.pattern.permute.xlu0 3
        %400 = vperm.xlu0 %399, %v279
        %v401 = vpop.permute.xlu0 %400
        %403 = vset.pattern.permute.xlu0 3
        %404 = vperm.xlu0 %403, %v280
        %v405 = vpop.permute.xlu0 %404
        %v407 = vadd.f32 %v377, %v385
        %v408 = vadd.f32 %v378, %v389
        %v409 = vadd.f32 %v379, %v393
        %v410 = vadd.f32 %v380, %v397
        %v411 = vadd.f32 %v381, %v401
        %v412 = vadd.f32 %v382, %v405
        %v413 = vmax.f32 %v407, 0.0
        %v414 = vmax.f32 %v408, 0.0
        %v415 = vmax.f32 %v409, 0.0
        %v416 = vmax.f32 %v410, 0.0
        %v417 = vmax.f32 %v411, 0.0
        %v418 = vmax.f32 %v412, 0.0
        %419 = vst [vmem:[%s211] sm:$0xff] %v413
        %420 = vst [vmem:[%s211 + $0x8] sm:$0xff] %v414
        %421 = vst [vmem:[%s211 + $0x10] sm:$0xff] %v415
        %422 = vst [vmem:[%s211 + $0x18] sm:$0xff] %v416
        %423 = vst [vmem:[%s211 + $0x20] sm:$0xff] %v417
        %424 = vst [vmem:[%s211 + $0x28] sm:$0xf] %v418
        %s425 = sand.u32 %s93, 1
        %s426 = scalar_lea.sflag [#allocation4], %s425
        %s427 = sand.u32 %s93, 1
        %s428 = smul.addr %s427, 48
        %s429 = scalar_lea.vmem [#allocation3], %s428
        // Predicated region
        $region71: #{tpu_custom_call.1} parent=65 // pred_check
          %p430 = pneg %p103
        $region72: #{tpu_custom_call.1} parent=65 // pred_check_branch
          %432 = sbr.rel (%p430) target = $region74
        $region73: #{tpu_custom_call.1} parent=65 // pred_region
          %434 = vsyncadd %s426, 0
          %s435 = smul.addr %s17, 8
          %s436 = scalar_lea.hbm %s3, %s435
          %s437 = sshll.u32 %s429, 4
          %s438 = int_to_ptr.vmem [resolvable:$true] %s437
          %s439 = sshll.u32 %s436, 4
          %s440 = int_to_ptr.hbm [resolvable:$true] %s439
          %445 = dma.vmem_to_hbm [thread:$0]  %s438, 768, %s440, %s426, 128, 256, 8
        $region74: #{tpu_custom_call.1} parent=65 // pred_fallthru
          _
      $region66: #{tpu_custom_call.1} parent=5 // pred_fallthru
        _
      %p446 = scmp.le.s32.totalorder 2, %s12
      // Predicated region
      $region75: #{tpu_custom_call.1} parent=5 // pred_check
        %p447 = pneg %p446
      $region76: #{tpu_custom_call.1} parent=5 // pred_check_branch
        %449 = sbr.rel (%p447) target = $region78
      $region77: #{tpu_custom_call.1} parent=5 // pred_region
        %s450 = ssub.s32 %s12, 2
        // Predicated region
        $region79: #{tpu_custom_call.1} parent=77 // pred_check
          %p451 = pneg %p109
        $region80: #{tpu_custom_call.1} parent=77 // pred_check_branch
          %453 = sbr.rel (%p451) target = $region82
        $region81: #{tpu_custom_call.1} parent=77 // pred_region
          %s454 = sand.u32 %s94, 1
          %s455 = scalar_lea.sflag [#allocation4], %s454
          %s456 = sand.u32 %s94, 1
          %s457 = smul.addr %s456, 48
          %s458 = scalar_lea.vmem [#allocation3], %s457
          %460 = dma.done %s455, 768
        $region82: #{tpu_custom_call.1} parent=77 // pred_fallthru
          _
      $region78: #{tpu_custom_call.1} parent=5 // pred_fallthru
        _
    $region6: #{tpu_custom_call.1} parent=1 // loop_footer
      %s16 = sadd.s32 1, %s12
    $region7: #{tpu_custom_call.1} parent=1 // loop_footer_branch
      %11 = sbr.rel target = $region3
    $region8: #{tpu_custom_call.1} parent=1 // loop_exit
      _
    %461 = vsyncpa [#allocation4], 1
    %s462 = scalar_lea.sflag [#allocation4], 1
    %463 = vsyncpa %s462, 1

</llo_original>
